<compile_context>
chip_gen: v6e
topology: v6e:2x2x1
jax: 0.10.0
libtpu: 0.0.40
codegen_flags: <defaults>
</compile_context>

<pallas_src>
import functools

import jax
import jax.numpy as jnp
from jax.experimental import pallas as pl
from jax.experimental.pallas import tpu as pltpu


def _round_up(n, m):
    return ((n + m - 1) // m) * m


def bigger_nn_kernel(x_ref, w1_ref, b1_ref, w2_ref, b2_ref, w3_ref, b3_ref, o_ref):
    cdt = w1_ref.dtype  # bf16 compute dtype for MXU operands
    x = x_ref[...].astype(cdt)
    # fc1 -> relu   (dropout p=0 => identity)
    h1 = jnp.dot(x, w1_ref[...], preferred_element_type=jnp.float32)
    h1 = jnp.maximum(h1 + b1_ref[...], 0.0)          # f32 epilogue (v5e-safe)
    # fc2 -> relu
    h2 = jnp.dot(h1.astype(cdt), w2_ref[...], preferred_element_type=jnp.float32)
    h2 = jnp.maximum(h2 + b2_ref[...], 0.0)
    # fc3 (no activation)
    o = jnp.dot(h2.astype(cdt), w3_ref[...], preferred_element_type=jnp.float32)
    o_ref[...] = (o + b3_ref[...]).astype(o_ref.dtype)
    # TODO(synk): training-mode dropout (p>0) would need pltpu.prng_seed /
    # prng_random_bits masking; p=0 (module default) is the identity.


@functools.partial(jax.jit, static_argnames=("tm", "compute_dtype"))
def bigger_nn_forward(x, params, *, tm=512, compute_dtype=jnp.bfloat16):
    """Fused 3-layer MLP forward.

    tm: batch tile (default 512 ≈ HBM-roofline sweet spot). For large B on
    v7x, prefer a tm such that cdiv(B, tm) >= 2 so both TensorCores are used.
    """
    w1, b1, w2, b2, w3, b3 = params
    B, F = x.shape
    H1 = w1.shape[1]          # 256
    H2 = w2.shape[1]          # 64
    N = w3.shape[1]

    # Cap the tile at the sublane-rounded batch (keeps tm a multiple of 8 so
    # the (8,128) rule holds; avoids oversized blocks for tiny batches).
    tm_eff = min(tm, _round_up(B, 8))
    grid = (pl.cdiv(B, tm_eff),)   # ragged edge handled by Pallas partial blocks

    # Weights -> bf16 once (tiny); biases stay f32.  x goes in untouched.
    w1c = w1.astype(compute_dtype)
    w2c = w2.astype(compute_dtype)
    w3c = w3.astype(compute_dtype)
    b1c = b1.astype(jnp.float32)
    b2c = b2.astype(jnp.float32)
    b3c = b3.astype(jnp.float32)

    witem = jnp.dtype(compute_dtype).itemsize
    bytes_accessed = (
        B * F * x.dtype.itemsize                         # x in (f32, no copy)
        + (F * H1 + H1 * H2 + H2 * N) * witem            # weights (bf16)
        + (H1 + H2 + N) * 4                              # biases (f32)
        + B * N * 4                                      # out (f32, unpadded)
    )
    cost = pl.CostEstimate(
        flops=2 * B * (F * H1 + H1 * H2 + H2 * N),
        transcendentals=0,
        bytes_accessed=bytes_accessed,
    )

    # Weight residency budget: at these shapes the resident weights are tiny.
    # For very large input_size, add a K grid axis over w1 with an f32
    # accumulator instead of keeping w1 fully resident, and size it against
    # v7x's 64 MiB physical / ~32 MiB scoped-default VMEM (set
    # vmem_limit_bytes explicitly via CompilerParams in that path).
    out = pl.pallas_call(
        bigger_nn_kernel,
        out_shape=jax.ShapeDtypeStruct((B, N), jnp.float32),
        grid=grid,
        in_specs=[
            pl.BlockSpec((tm_eff, F), lambda i: (i, 0)),   # x: pipelined per tile
            pl.BlockSpec((F, H1), lambda i: (0, 0)),       # w1: VMEM-resident
            pl.BlockSpec((1, H1), lambda i: (0, 0)),       # b1
            pl.BlockSpec((H1, H2), lambda i: (0, 0)),      # w2
            pl.BlockSpec((1, H2), lambda i: (0, 0)),       # b2
            pl.BlockSpec((H2, N), lambda i: (0, 0)),       # w3
            pl.BlockSpec((1, N), lambda i: (0, 0)),        # b3
        ],
        out_specs=pl.BlockSpec((tm_eff, N), lambda i: (i, 0)),
        compiler_params=pltpu.CompilerParams(
            dimension_semantics=("parallel",),             # megacore split on v7x
        ),
        cost_estimate=cost,
    )(x, w1c, b1c, w2c, b2c, w3c, b3c)

    return out


def init_params(key, input_size, output_size):
    """Deterministic PyTorch-style (uniform +-1/sqrt(fan_in)) init."""
    def linear(key, fan_in, fan_out):
        kw, kb = jax.random.split(key)
        bound = 1.0 / jnp.sqrt(fan_in)
        w = jax.random.uniform(kw, (fan_in, fan_out), jnp.float32, -bound, bound)
        b = jax.random.uniform(kb, (1, fan_out), jnp.float32, -bound, bound)
        return w, b

    k1, k2, k3 = jax.random.split(key, 3)
    w1, b1 = linear(k1, input_size, 256)
    w2, b2 = linear(k2, 256, 64)
    w3, b3 = linear(k3, 64, output_size)
    return (w1, b1, w2, b2, w3, b3)


def reference_forward(x, params, compute_dtype=jnp.bfloat16):
    """Pure-JAX reference using the same bf16-operand / f32-accumulate math."""
    w1, b1, w2, b2, w3, b3 = params
    c = compute_dtype
    h = jnp.dot(x.astype(c), w1.astype(c), preferred_element_type=jnp.float32) + b1
    h = jnp.maximum(h, 0.0)
    h = jnp.dot(h.astype(c), w2.astype(c), preferred_element_type=jnp.float32) + b2
    h = jnp.maximum(h, 0.0)
    return jnp.dot(h.astype(c), w3.astype(c), preferred_element_type=jnp.float32) + b3


if __name__ == "__main__":
    key = jax.random.PRNGKey(0)
    k_params, k_x = jax.random.split(key)

    batch, input_size, output_size = 8, 32, 16
    params = init_params(k_params, input_size, output_size)
    x = jax.random.normal(k_x, (batch, input_size), jnp.float32)

    out = bigger_nn_forward(x, params)
    out = jax.block_until_ready(out)

    ref = reference_forward(x, params)
    assert out.shape == (batch, output_size), out.shape
    assert jnp.allclose(out, ref, atol=2e-2, rtol=2e-2), float(
        jnp.max(jnp.abs(out - ref))
    )

    print("KERNEL_OK")
</pallas_src>

<mosaic_0001>
module attributes {stable_mosaic.version = 11 : i64} {
  func.func @bigger_nn_kernel(%arg0: i32, %arg1: memref<8x32xf32, #tpu.memory_space<vmem>>, %arg2: memref<32x256xbf16, #tpu.memory_space<vmem>>, %arg3: memref<1x256xf32, #tpu.memory_space<vmem>>, %arg4: memref<256x64xbf16, #tpu.memory_space<vmem>>, %arg5: memref<1x64xf32, #tpu.memory_space<vmem>>, %arg6: memref<64x16xbf16, #tpu.memory_space<vmem>>, %arg7: memref<1x16xf32, #tpu.memory_space<vmem>>, %arg8: memref<8x16xf32, #tpu.memory_space<vmem>>) attributes {dimension_semantics = [#tpu.dimension_semantics<parallel>], iteration_bounds = array<i64: 1>, scalar_prefetch = 0 : i64, scratch_operands = 0 : i64, tpu.core_type = #tpu.core_type<tc>, window_params = [{transform_indices = @transform_0, window_bounds = array<i64: 8, 32>}, {pipeline_mode = #tpu.pipeline_mode<synchronous>, transform_indices = @transform_1, window_bounds = array<i64: 32, 256>}, {pipeline_mode = #tpu.pipeline_mode<synchronous>, transform_indices = @transform_2, window_bounds = array<i64: 1, 256>}, {pipeline_mode = #tpu.pipeline_mode<synchronous>, transform_indices = @transform_3, window_bounds = array<i64: 256, 64>}, {pipeline_mode = #tpu.pipeline_mode<synchronous>, transform_indices = @transform_4, window_bounds = array<i64: 1, 64>}, {pipeline_mode = #tpu.pipeline_mode<synchronous>, transform_indices = @transform_5, window_bounds = array<i64: 64, 16>}, {pipeline_mode = #tpu.pipeline_mode<synchronous>, transform_indices = @transform_6, window_bounds = array<i64: 1, 16>}, {transform_indices = @transform_7, window_bounds = array<i64: 8, 16>}]} {
    %c0 = arith.constant 0 : index
    %c0_0 = arith.constant 0 : index
    %0 = vector.load %arg1[%c0, %c0_0] : memref<8x32xf32, #tpu.memory_space<vmem>>, vector<8x32xf32>
    %1 = arith.truncf %0 : vector<8x32xf32> to vector<8x32xbf16>
    %c0_1 = arith.constant 0 : index
    %c0_2 = arith.constant 0 : index
    %2 = vector.load %arg2[%c0_1, %c0_2] : memref<32x256xbf16, #tpu.memory_space<vmem>>, vector<32x256xbf16>
    %cst = arith.constant dense<0.000000e+00> : vector<8x256xf32>
    %3 = tpu.matmul %1, %2, %cst {dimension_numbers = #tpu.dot_dimension_numbers<[1], [0], [0], [1], [0, 0, 1, 1], [], []>} : vector<8x32xbf16>, vector<32x256xbf16>, vector<8x256xf32> -> vector<8x256xf32>
    %c0_3 = arith.constant 0 : index
    %c0_4 = arith.constant 0 : index
    %4 = vector.load %arg3[%c0_3, %c0_4] : memref<1x256xf32, #tpu.memory_space<vmem>>, vector<1x256xf32>
    %5 = vector.broadcast %4 : vector<1x256xf32> to vector<8x256xf32>
    %6 = arith.addf %3, %5 : vector<8x256xf32>
    %cst_5 = arith.constant 0.000000e+00 : f32
    %7 = vector.broadcast %cst_5 : f32 to vector<8x256xf32>
    %8 = arith.maximumf %6, %7 : vector<8x256xf32>
    %9 = arith.truncf %8 : vector<8x256xf32> to vector<8x256xbf16>
    %c0_6 = arith.constant 0 : index
    %c0_7 = arith.constant 0 : index
    %10 = vector.load %arg4[%c0_6, %c0_7] : memref<256x64xbf16, #tpu.memory_space<vmem>>, vector<256x64xbf16>
    %cst_8 = arith.constant dense<0.000000e+00> : vector<8x64xf32>
    %11 = tpu.matmul %9, %10, %cst_8 {dimension_numbers = #tpu.dot_dimension_numbers<[1], [0], [0], [1], [0, 0, 1, 1], [], []>} : vector<8x256xbf16>, vector<256x64xbf16>, vector<8x64xf32> -> vector<8x64xf32>
    %c0_9 = arith.constant 0 : index
    %c0_10 = arith.constant 0 : index
    %12 = vector.load %arg5[%c0_9, %c0_10] : memref<1x64xf32, #tpu.memory_space<vmem>>, vector<1x64xf32>
    %13 = vector.broadcast %12 : vector<1x64xf32> to vector<8x64xf32>
    %14 = arith.addf %11, %13 : vector<8x64xf32>
    %cst_11 = arith.constant 0.000000e+00 : f32
    %15 = vector.broadcast %cst_11 : f32 to vector<8x64xf32>
    %16 = arith.maximumf %14, %15 : vector<8x64xf32>
    %17 = arith.truncf %16 : vector<8x64xf32> to vector<8x64xbf16>
    %c0_12 = arith.constant 0 : index
    %c0_13 = arith.constant 0 : index
    %18 = vector.load %arg6[%c0_12, %c0_13] : memref<64x16xbf16, #tpu.memory_space<vmem>>, vector<64x16xbf16>
    %cst_14 = arith.constant dense<0.000000e+00> : vector<8x16xf32>
    %19 = tpu.matmul %17, %18, %cst_14 {dimension_numbers = #tpu.dot_dimension_numbers<[1], [0], [0], [1], [0, 0, 1, 1], [], []>} : vector<8x64xbf16>, vector<64x16xbf16>, vector<8x16xf32> -> vector<8x16xf32>
    %c0_15 = arith.constant 0 : index
    %c0_16 = arith.constant 0 : index
    %20 = vector.load %arg7[%c0_15, %c0_16] : memref<1x16xf32, #tpu.memory_space<vmem>>, vector<1x16xf32>
    %21 = vector.broadcast %20 : vector<1x16xf32> to vector<8x16xf32>
    %22 = arith.addf %19, %21 : vector<8x16xf32>
    %c0_17 = arith.constant 0 : index
    %c0_18 = arith.constant 0 : index
    %23 = vector.load %arg8[%c0_17, %c0_18] : memref<8x16xf32, #tpu.memory_space<vmem>>, vector<8x16xf32>
    tpu.vector_store %arg8[%c0_17, %c0_18], %22 {strides = array<i32>} : memref<8x16xf32, #tpu.memory_space<vmem>>, vector<8x16xf32>,
    return
  }
  func.func @transform_0(%arg0: i32) -> (i32, i32) {
    %c0_i32 = arith.constant 0 : i32
    %c0_i32_0 = arith.constant 0 : i32
    return %arg0, %c0_i32 : i32, i32
  }
  func.func @transform_1(%arg0: i32) -> (i32, i32) {
    %c0_i32 = arith.constant 0 : i32
    %c0_i32_0 = arith.constant 0 : i32
    %c0_i32_1 = arith.constant 0 : i32
    return %c0_i32, %c0_i32_0 : i32, i32
  }
  func.func @transform_2(%arg0: i32) -> (i32, i32) {
    %c0_i32 = arith.constant 0 : i32
    %c0_i32_0 = arith.constant 0 : i32
    %c0_i32_1 = arith.constant 0 : i32
    return %c0_i32, %c0_i32_0 : i32, i32
  }
  func.func @transform_3(%arg0: i32) -> (i32, i32) {
    %c0_i32 = arith.constant 0 : i32
    %c0_i32_0 = arith.constant 0 : i32
    %c0_i32_1 = arith.constant 0 : i32
    return %c0_i32, %c0_i32_0 : i32, i32
  }
  func.func @transform_4(%arg0: i32) -> (i32, i32) {
    %c0_i32 = arith.constant 0 : i32
    %c0_i32_0 = arith.constant 0 : i32
    %c0_i32_1 = arith.constant 0 : i32
    return %c0_i32, %c0_i32_0 : i32, i32
  }
  func.func @transform_5(%arg0: i32) -> (i32, i32) {
    %c0_i32 = arith.constant 0 : i32
    %c0_i32_0 = arith.constant 0 : i32
    %c0_i32_1 = arith.constant 0 : i32
    return %c0_i32, %c0_i32_0 : i32, i32
  }
  func.func @transform_6(%arg0: i32) -> (i32, i32) {
    %c0_i32 = arith.constant 0 : i32
    %c0_i32_0 = arith.constant 0 : i32
    %c0_i32_1 = arith.constant 0 : i32
    return %c0_i32, %c0_i32_0 : i32, i32
  }
  func.func @transform_7(%arg0: i32) -> (i32, i32) {
    %c0_i32 = arith.constant 0 : i32
    %c0_i32_0 = arith.constant 0 : i32
    return %arg0, %c0_i32 : i32, i32
  }
}

</mosaic_0001>

<llo_original>
// kernel: bigger_nn_forward.1
$region0: #{bigger_nn_forward.1}
  #allocation0 [shape = 'u32[]', space=smem, size = 0x4, offset = 0x4, fixed_abs, tag = 'smem constant byte address 0x4 - core index']
  #allocation1 [shape = 'u32[144,128]{1,0:T(1,128)}', space=vmem, size = 0x12000, scoped, tag = 'internal scratch']
  %s0 = inlined_call_operand.vmem [shape: f32[8,32], index: 0, kind: input, shape index: {}]
  %s1 = inlined_call_operand.vmem [shape: bf16[32,256], index: 1, kind: input, shape index: {}]
  %s2 = inlined_call_operand.vmem [shape: f32[1,256], index: 2, kind: input, shape index: {}]
  %s3 = inlined_call_operand.vmem [shape: bf16[256,64], index: 3, kind: input, shape index: {}]
  %s4 = inlined_call_operand.vmem [shape: f32[1,64], index: 4, kind: input, shape index: {}]
  %s5 = inlined_call_operand.vmem [shape: bf16[64,16], index: 5, kind: input, shape index: {}]
  %s6 = inlined_call_operand.vmem [shape: f32[1,16], index: 6, kind: input, shape index: {}]
  %s7 = inlined_call_operand.hbm [shape: f32[8,16], index: 7, kind: output, shape index: {}]
  %s8 = sld [smem:[#allocation0]]
  $region38: #{bigger_nn_forward.1} parent=0
    _
  %s10 = ssub.s32 1, %s8
  %s11 = scalar_select 0, %s10, %s8
  $region1: #{bigger_nn_forward.1} parent=0
    #allocation2 [shape = 'u8[4096]{0}', space=vmem, size = 0x1000, scoped, tag = 'output window, operand 0, single buffered']
    #allocation3 [shape = 's32[1]{0}', space=sflag, size = 0x4, scoped, tag = 'scoped memory for bigger_nn_forward.1']
    %12 = vsyncpa [#allocation3], 0
    // Predicated region
    $region2: #{bigger_nn_forward.1} parent=1 // pred_check
      _
    $region3: #{bigger_nn_forward.1} parent=1 // pred_check_branch
      %14 = sbr.rel (0) target = $region5
    $region4: #{bigger_nn_forward.1} parent=1 // pred_region
      _
    $region5: #{bigger_nn_forward.1} parent=1 // pred_fallthru
      _
    // Predicated region
    $region6: #{bigger_nn_forward.1} parent=1 // pred_check
      _
    $region7: #{bigger_nn_forward.1} parent=1 // pred_check_branch
      %16 = sbr.rel (0) target = $region9
    $region8: #{bigger_nn_forward.1} parent=1 // pred_region
      _
    $region9: #{bigger_nn_forward.1} parent=1 // pred_fallthru
      _
    // Predicated region
    $region10: #{bigger_nn_forward.1} parent=1 // pred_check
      _
    $region11: #{bigger_nn_forward.1} parent=1 // pred_check_branch
      %18 = sbr.rel (0) target = $region13
    $region12: #{bigger_nn_forward.1} parent=1 // pred_region
      _
    $region13: #{bigger_nn_forward.1} parent=1 // pred_fallthru
      _
    // Predicated region
    $region14: #{bigger_nn_forward.1} parent=1 // pred_check
      _
    $region15: #{bigger_nn_forward.1} parent=1 // pred_check_branch
      %20 = sbr.rel (0) target = $region17
    $region16: #{bigger_nn_forward.1} parent=1 // pred_region
      _
    $region17: #{bigger_nn_forward.1} parent=1 // pred_fallthru
      _
    // Predicated region
    $region18: #{bigger_nn_forward.1} parent=1 // pred_check
      _
    $region19: #{bigger_nn_forward.1} parent=1 // pred_check_branch
      %22 = sbr.rel (0) target = $region21
    $region20: #{bigger_nn_forward.1} parent=1 // pred_region
      _
    $region21: #{bigger_nn_forward.1} parent=1 // pred_fallthru
      _
    // Predicated region
    $region22: #{bigger_nn_forward.1} parent=1 // pred_check
      _
    $region23: #{bigger_nn_forward.1} parent=1 // pred_check_branch
      %24 = sbr.rel (0) target = $region25
    $region24: #{bigger_nn_forward.1} parent=1 // pred_region
      _
    $region25: #{bigger_nn_forward.1} parent=1 // pred_fallthru
      _
    // Predicated region
    $region26: #{bigger_nn_forward.1} parent=1 // pred_check
      _
    $region27: #{bigger_nn_forward.1} parent=1 // pred_check_branch
      %26 = sbr.rel (0) target = $region29
    $region28: #{bigger_nn_forward.1} parent=1 // pred_region
      _
    $region29: #{bigger_nn_forward.1} parent=1 // pred_fallthru
      _
    %v28 = vld [vmem:[%s0] sm:$0xff]
    %v29 = vpack.c.bf16 %v28, %v28
    %v30 = vld [vmem:[%s1] sm:$0xff]
    %v31 = vld [vmem:[%s1 + $0x8] sm:$0xff]
    %v32 = vld [vmem:[%s1 + $0x10] sm:$0xff]
    %v33 = vld [vmem:[%s1 + $0x18] sm:$0xff]
    %v34 = vld [vmem:[%s2] sm:$0x3]
    %v36 = vlaneseq
    %v37 = vshrl.u32 %v36, 7
    %v38 = vsub.s32 0, %v37
    %v39 = vrot.slane %v34, %v38
    %v40 = vlaneseq
    %v41 = vshrl.u32 %v40, 7
    %v42 = vsub.s32 1, %v41
    %v43 = vrot.slane %v34, %v42
    %v50 = vunpack.c.l.b16 %v30
    %v51 = vunpack.c.h.b16 %v30
    %v52 = vunpack.c.l.b16 %v31
    %v53 = vunpack.c.h.b16 %v31
    %v54 = vunpack.c.l.b16 %v32
    %v55 = vunpack.c.h.b16 %v32
    %v56 = vunpack.c.l.b16 %v33
    %v57 = vunpack.c.h.b16 %v33
    %v58 = vpack.c.b16 %v52, %v50
    %v59 = vpack.c.b16 %v53, %v51
    %v60 = vpack.c.b16 %v56, %v54
    %v61 = vpack.c.b16 %v57, %v55
    %vm66 = vcmask 261120
    %v68 = vsel %vm66, %v29, 0
    %70 = vmatprep.subr.bf16.mxu0 0
    %71 = vmatpush1.bf16.msra.mxu0 0
    %72 = vmatprep.subr.bf16.mxu0 0
    %73 = vmatpush1.bf16.msra.mxu0 0
    %74 = vmatprep.subr.bf16.mxu0 0
    %75 = vmatpush1.bf16.msra.mxu0 0
    %76 = vmatprep.subr.bf16.mxu0 0
    %77 = vmatpush1.bf16.msra.mxu0 0
    %78 = vmatprep.subr.bf16.mxu0 0
    %79 = vmatpush1.bf16.msra.mxu0 0
    %80 = vmatprep.subr.bf16.mxu0 0
    %81 = vmatpush1.bf16.msra.mxu0 0
    %82 = vmatprep.subr.bf16.mxu0 %v61
    %83 = vmatpush1.bf16.msra.mxu0 %v60
    %84 = vmatprep.subr.bf16.mxu0 %v59
    %85 = vmatpush1.bf16.msra.mxu0 %v58
    %86 = vmatprep.subr.bf16.mxu0 0
    %87 = vmatpush2.bf16.msra.mxu0 0
    %88 = vmatprep.subr.bf16.mxu0 0
    %89 = vmatpush2.bf16.msra.mxu0 0
    %90 = vmatprep.subr.bf16.mxu0 0
    %91 = vmatpush2.bf16.msra.mxu0 0
    %92 = vmatprep.subr.bf16.mxu0 0
    %93 = vmatpush2.bf16.msra.mxu0 0
    %94 = vmatprep.subr.bf16.mxu0 0
    %95 = vmatpush2.bf16.msra.mxu0 0
    %96 = vmatprep.subr.bf16.mxu0 0
    %97 = vmatpush2.bf16.msra.mxu0 0
    %98 = vmatprep.subr.bf16.mxu0 0
    %99 = vmatpush2.bf16.msra.mxu0 0
    %100 = vmatprep.subr.bf16.mxu0 0
    %101 = vmatpush2.bf16.msra.mxu0 0
    %102 = vmatprep.mubr.bf16.mxu0 0
    %103 = vmatmul.mubr.bf16.gmra.mxu0 %v68
    %v104 = vpop.f32.mrf.mxu0
    %v105 = vadd.f32 %v39, %v104
    %v106 = vpop.f32.mrf.mxu0
    %v107 = vadd.f32 %v43, %v106
    %v108 = vpop.f32.mrf.mxu0
    %v109 = vpop.f32.mrf.mxu0
    %110 = vdwg.mxu0
    %v111 = vmax.f32 %v105, 0.0
    %v112 = vmax.f32 %v107, 0.0
    %v113 = vpack.c.bf16 %v111, %v111
    %v114 = vpack.c.bf16 %v112, %v112
    %v115 = vld [vmem:[%s3] sm:$0xf]
    %v116 = vld [vmem:[%s3 + $0x4] sm:$0xf]
    %v117 = vld [vmem:[%s3 + $0x8] sm:$0xf]
    %v118 = vld [vmem:[%s3 + $0xc] sm:$0xf]
    %v119 = vld [vmem:[%s3 + $0x10] sm:$0xf]
    %v120 = vld [vmem:[%s3 + $0x14] sm:$0xf]
    %v121 = vld [vmem:[%s3 + $0x18] sm:$0xf]
    %v122 = vld [vmem:[%s3 + $0x1c] sm:$0xf]
    %v123 = vld [vmem:[%s3 + $0x20] sm:$0xf]
    %v124 = vld [vmem:[%s3 + $0x24] sm:$0xf]
    %v125 = vld [vmem:[%s3 + $0x28] sm:$0xf]
    %v126 = vld [vmem:[%s3 + $0x2c] sm:$0xf]
    %v127 = vld [vmem:[%s3 + $0x30] sm:$0xf]
    %v128 = vld [vmem:[%s3 + $0x34] sm:$0xf]
    %v129 = vld [vmem:[%s3 + $0x38] sm:$0xf]
    %v130 = vld [vmem:[%s3 + $0x3c] sm:$0xf]
    %v131 = vld [vmem:[%s3 + $0x40] sm:$0xf]
    %v132 = vld [vmem:[%s3 + $0x44] sm:$0xf]
    %v133 = vld [vmem:[%s3 + $0x48] sm:$0xf]
    %v134 = vld [vmem:[%s3 + $0x4c] sm:$0xf]
    %v135 = vld [vmem:[%s3 + $0x50] sm:$0xf]
    %v136 = vld [vmem:[%s3 + $0x54] sm:$0xf]
    %v137 = vld [vmem:[%s3 + $0x58] sm:$0xf]
    %v138 = vld [vmem:[%s3 + $0x5c] sm:$0xf]
    %v139 = vld [vmem:[%s3 + $0x60] sm:$0xf]
    %v140 = vld [vmem:[%s3 + $0x64] sm:$0xf]
    %v141 = vld [vmem:[%s3 + $0x68] sm:$0xf]
    %v142 = vld [vmem:[%s3 + $0x6c] sm:$0xf]
    %v143 = vld [vmem:[%s3 + $0x70] sm:$0xf]
    %v144 = vld [vmem:[%s3 + $0x74] sm:$0xf]
    %v145 = vld [vmem:[%s3 + $0x78] sm:$0xf]
    %v146 = vld [vmem:[%s3 + $0x7c] sm:$0xf]
    %v147 = vld [vmem:[%s4] sm:$0x1]
    %v149 = vlaneseq
    %v150 = vshrl.u32 %v149, 7
    %v151 = vsub.s32 0, %v150
    %v152 = vrot.slane %v147, %v151
    %v186 = vunpack.c.l.b16 %v115
    %v187 = vunpack.c.l.b16 %v116
    %v188 = vunpack.c.l.b16 %v117
    %v189 = vunpack.c.l.b16 %v118
    %v190 = vunpack.c.l.b16 %v119
    %v191 = vunpack.c.l.b16 %v120
    %v192 = vunpack.c.l.b16 %v121
    %v193 = vunpack.c.l.b16 %v122
    %v194 = vunpack.c.l.b16 %v123
    %v195 = vunpack.c.l.b16 %v124
    %v196 = vunpack.c.l.b16 %v125
    %v197 = vunpack.c.l.b16 %v126
    %v198 = vunpack.c.l.b16 %v127
    %v199 = vunpack.c.l.b16 %v128
    %v200 = vunpack.c.l.b16 %v129
    %v201 = vunpack.c.l.b16 %v130
    %v202 = vunpack.c.l.b16 %v131
    %v203 = vunpack.c.l.b16 %v132
    %v204 = vunpack.c.l.b16 %v133
    %v205 = vunpack.c.l.b16 %v134
    %v206 = vunpack.c.l.b16 %v135
    %v207 = vunpack.c.l.b16 %v136
    %v208 = vunpack.c.l.b16 %v137
    %v209 = vunpack.c.l.b16 %v138
    %v210 = vunpack.c.l.b16 %v139
    %v211 = vunpack.c.l.b16 %v140
    %v212 = vunpack.c.l.b16 %v141
    %v213 = vunpack.c.l.b16 %v142
    %v214 = vunpack.c.l.b16 %v143
    %v215 = vunpack.c.l.b16 %v144
    %v216 = vunpack.c.l.b16 %v145
    %v217 = vunpack.c.l.b16 %v146
    %v218 = vpack.c.b16 %v187, %v186
    %v219 = vpack.c.b16 %v189, %v188
    %v220 = vpack.c.b16 %v191, %v190
    %v221 = vpack.c.b16 %v193, %v192
    %v222 = vpack.c.b16 %v195, %v194
    %v223 = vpack.c.b16 %v197, %v196
    %v224 = vpack.c.b16 %v199, %v198
    %v225 = vpack.c.b16 %v201, %v200
    %v226 = vpack.c.b16 %v203, %v202
    %v227 = vpack.c.b16 %v205, %v204
    %v228 = vpack.c.b16 %v207, %v206
    %v229 = vpack.c.b16 %v209, %v208
    %v230 = vpack.c.b16 %v211, %v210
    %v231 = vpack.c.b16 %v213, %v212
    %v232 = vpack.c.b16 %v215, %v214
    %v233 = vpack.c.b16 %v217, %v216
    %250 = vmatprep.subr.bf16.mxu0 0
    %251 = vmatpush1.bf16.msra.mxu0 %v225
    %252 = vmatprep.subr.bf16.mxu0 0
    %253 = vmatpush1.bf16.msra.mxu0 %v224
    %254 = vmatprep.subr.bf16.mxu0 0
    %255 = vmatpush1.bf16.msra.mxu0 %v223
    %256 = vmatprep.subr.bf16.mxu0 0
    %257 = vmatpush1.bf16.msra.mxu0 %v222
    %258 = vmatprep.subr.bf16.mxu0 0
    %259 = vmatpush1.bf16.msra.mxu0 %v221
    %260 = vmatprep.subr.bf16.mxu0 0
    %261 = vmatpush1.bf16.msra.mxu0 %v220
    %262 = vmatprep.subr.bf16.mxu0 0
    %263 = vmatpush1.bf16.msra.mxu0 %v219
    %264 = vmatprep.subr.bf16.mxu0 0
    %265 = vmatpush1.bf16.msra.mxu0 %v218
    %266 = vmatprep.subr.bf16.mxu0 0
    %267 = vmatpush2.bf16.msra.mxu0 %v233
    %268 = vmatprep.subr.bf16.mxu0 0
    %269 = vmatpush2.bf16.msra.mxu0 %v232
    %270 = vmatprep.subr.bf16.mxu0 0
    %271 = vmatpush2.bf16.msra.mxu0 %v231
    %272 = vmatprep.subr.bf16.mxu0 0
    %273 = vmatpush2.bf16.msra.mxu0 %v230
    %274 = vmatprep.subr.bf16.mxu0 0
    %275 = vmatpush2.bf16.msra.mxu0 %v229
    %276 = vmatprep.subr.bf16.mxu0 0
    %277 = vmatpush2.bf16.msra.mxu0 %v228
    %278 = vmatprep.subr.bf16.mxu0 0
    %279 = vmatpush2.bf16.msra.mxu0 %v227
    %280 = vmatprep.subr.bf16.mxu0 0
    %281 = vmatpush2.bf16.msra.mxu0 %v226
    %282 = vmatprep.mubr.bf16.mxu0 %v114
    %283 = vmatmul.mubr.bf16.gmra.mxu0 %v113
    %v284 = vpop.f32.mrf.mxu0
    %v285 = vadd.f32 %v152, %v284
    %v286 = vpop.f32.mrf.mxu0
    %v287 = vpop.f32.mrf.mxu0
    %v288 = vpop.f32.mrf.mxu0
    %289 = vdwg.mxu0
    %v290 = vmax.f32 %v285, 0.0
    %v291 = vpack.c.bf16 %v290, %v290
    %v292 = vld [vmem:[%s5] sm:$0xf]
    %v293 = vld [vmem:[%s5 + $0x4] sm:$0xf]
    %v294 = vld [vmem:[%s5 + $0x8] sm:$0xf]
    %v295 = vld [vmem:[%s5 + $0xc] sm:$0xf]
    %v296 = vld [vmem:[%s5 + $0x10] sm:$0xf]
    %v297 = vld [vmem:[%s5 + $0x14] sm:$0xf]
    %v298 = vld [vmem:[%s5 + $0x18] sm:$0xf]
    %v299 = vld [vmem:[%s5 + $0x1c] sm:$0xf]
    %v300 = vld [vmem:[%s6] sm:$0x1]
    %v302 = vlaneseq
    %v303 = vshrl.u32 %v302, 7
    %v304 = vsub.s32 0, %v303
    %v305 = vrot.slane %v300, %v304
    %v315 = vunpack.c.l.b16 %v292
    %v316 = vunpack.c.l.b16 %v293
    %v317 = vunpack.c.l.b16 %v294
    %v318 = vunpack.c.l.b16 %v295
    %v319 = vunpack.c.l.b16 %v296
    %v320 = vunpack.c.l.b16 %v297
    %v321 = vunpack.c.l.b16 %v298
    %v322 = vunpack.c.l.b16 %v299
    %v323 = vpack.c.b16 %v316, %v315
    %v324 = vpack.c.b16 %v318, %v317
    %v325 = vpack.c.b16 %v320, %v319
    %v326 = vpack.c.b16 %v322, %v321
    %vm331 = vcmask 523264
    %v333 = vsel %vm331, %v291, 0
    %335 = vmatprep.subr.bf16.mxu0 0
    %336 = vmatpush1.bf16.msra.mxu0 0
    %337 = vmatprep.subr.bf16.mxu0 0
    %338 = vmatpush1.bf16.msra.mxu0 0
    %339 = vmatprep.subr.bf16.mxu0 0
    %340 = vmatpush1.bf16.msra.mxu0 0
    %341 = vmatprep.subr.bf16.mxu0 0
    %342 = vmatpush1.bf16.msra.mxu0 0
    %343 = vmatprep.subr.bf16.mxu0 0
    %344 = vmatpush1.bf16.msra.mxu0 %v326
    %345 = vmatprep.subr.bf16.mxu0 0
    %346 = vmatpush1.bf16.msra.mxu0 %v325
    %347 = vmatprep.subr.bf16.mxu0 0
    %348 = vmatpush1.bf16.msra.mxu0 %v324
    %349 = vmatprep.subr.bf16.mxu0 0
    %350 = vmatpush1.bf16.msra.mxu0 %v323
    %351 = vmatprep.subr.bf16.mxu0 0
    %352 = vmatpush2.bf16.msra.mxu0 0
    %353 = vmatprep.subr.bf16.mxu0 0
    %354 = vmatpush2.bf16.msra.mxu0 0
    %355 = vmatprep.subr.bf16.mxu0 0
    %356 = vmatpush2.bf16.msra.mxu0 0
    %357 = vmatprep.subr.bf16.mxu0 0
    %358 = vmatpush2.bf16.msra.mxu0 0
    %359 = vmatprep.subr.bf16.mxu0 0
    %360 = vmatpush2.bf16.msra.mxu0 0
    %361 = vmatprep.subr.bf16.mxu0 0
    %362 = vmatpush2.bf16.msra.mxu0 0
    %363 = vmatprep.subr.bf16.mxu0 0
    %364 = vmatpush2.bf16.msra.mxu0 0
    %365 = vmatprep.subr.bf16.mxu0 0
    %366 = vmatpush2.bf16.msra.mxu0 0
    %367 = vmatprep.mubr.bf16.mxu0 0
    %368 = vmatmul.mubr.bf16.gmra.mxu0 %v333
    %v369 = vpop.f32.mrf.mxu0
    %v370 = vadd.f32 %v305, %v369
    %v371 = vpop.f32.mrf.mxu0
    %v372 = vpop.f32.mrf.mxu0
    %v373 = vpop.f32.mrf.mxu0
    %374 = vdwg.mxu0
    %vm375 = vcmask 130048
    %376 = vst.msk [vmem:[#allocation2] sm:$0xff] %vm375, %v370
    // Predicated region
    $region30: #{bigger_nn_forward.1} parent=1 // pred_check
      _
    $region31: #{bigger_nn_forward.1} parent=1 // pred_check_branch
      %378 = sbr.rel (0) target = $region33
    $region32: #{bigger_nn_forward.1} parent=1 // pred_region
      %s380 = ssub.s32 128, 128
      %381 = vsyncadd [#allocation3], %s380
      %s383 = sshll.u32 [#allocation2], 4
      %s384 = int_to_ptr.vmem [resolvable:$true] %s383
      %386 = dma.vmem_to_hbm [thread:$0]  %s384, 128, %s7, [#allocation3]
    $region33: #{bigger_nn_forward.1} parent=1 // pred_fallthru
      _
    // Predicated region
    $region34: #{bigger_nn_forward.1} parent=1 // pred_check
      _
    $region35: #{bigger_nn_forward.1} parent=1 // pred_check_branch
      %388 = sbr.rel (0) target = $region37
    $region36: #{bigger_nn_forward.1} parent=1 // pred_region
      %389 = dma.done [#allocation3], 128
    $region37: #{bigger_nn_forward.1} parent=1 // pred_fallthru
      _
    %390 = vsyncpa [#allocation3], 1

</llo_original>
